<compile_context>
chip_gen: v6e
topology: v6e:2x2x1
jax: 0.10.0
libtpu: 0.0.40
codegen_flags: <defaults>
</compile_context>

<pallas_src>
import math
import functools

import jax
import jax.numpy as jnp
import numpy as np
from jax import lax
from jax.experimental import pallas as pl
from jax.experimental.pallas import tpu as pltpu

LN_EPS = 1e-5
GELU_C = math.sqrt(2.0 / math.pi)
# Raised scoped-VMEM limit (resident bf16 weights + activation tiles at realistic C),
# kept below v7x's 64 MiB physical VMEM for headroom.
VMEM_LIMIT_BYTES = 48 * 1024 * 1024


def _layernorm(x, w, b):
    # f32 statistics (v5e VPU/EUP have no bf16 path anyway).
    mu = jnp.mean(x, axis=-1, keepdims=True)
    var = jnp.mean((x - mu) * (x - mu), axis=-1, keepdims=True)
    return (x - mu) * lax.rsqrt(var + LN_EPS) * w + b


def _pick_tq(T):
    # Lane/sublane friendly q-row tiles; prefer >=2 tiles so the second grid axis
    # can be sharded across TensorCores (v7x megacore).
    for cand in (256, 128, 64, 32, 16, 8):
        if T % cand == 0 and T // cand >= 2:
            return cand
    for cand in (256, 128, 64, 32, 16, 8):
        if T % cand == 0:
            return cand
    return T


# --------------------------------------------------------------------------- #
# Kernel 1: LayerNorm1 + c_attn projection, emits scaled q, k, v in bf16.
# --------------------------------------------------------------------------- #
def qkv_kernel(n_head, x_ref, ln1w_ref, ln1b_ref, wqkv_ref, bqkv_ref,
               q_ref, k_ref, v_ref):
    x = x_ref[0]                              # (TQ, C) f32
    C = x.shape[1]
    hd = C // n_head
    scale = 1.0 / math.sqrt(hd)

    h = _layernorm(x, ln1w_ref[0], ln1b_ref[0])                       # f32
    qkv = jnp.dot(h.astype(jnp.bfloat16), wqkv_ref[...],
                  preferred_element_type=jnp.float32) + bqkv_ref[0]   # (TQ, 3C) f32

    q_ref[0] = (qkv[:, 0 * C:1 * C] * scale).astype(jnp.bfloat16)     # fold 1/sqrt(hd)
    k_ref[0] = qkv[:, 1 * C:2 * C].astype(jnp.bfloat16)
    v_ref[0] = qkv[:, 2 * C:3 * C].astype(jnp.bfloat16)


# --------------------------------------------------------------------------- #
# Kernel 2: causal attention (q-tile vs full K/V) + proj + residual
#           + LayerNorm2 + MLP (tanh GELU) + residual.
# --------------------------------------------------------------------------- #
def attn_mlp_kernel(n_head,
                    x_ref, q_ref, k_ref, v_ref,
                    wattn_ref, battn_ref,
                    ln2w_ref, ln2b_ref,
                    wfc_ref, bfc_ref, wmlp_ref, bmlp_ref,
                    o_ref, y_scratch):
    qi = pl.program_id(1)

    x = x_ref[0]                              # (TQ, C) f32
    q = q_ref[0]                              # (TQ, C) bf16, pre-scaled
    k = k_ref[0]                              # (T,  C) bf16
    v = v_ref[0]                              # (T,  C) bf16
    TQ, C = x.shape
    T = k.shape[0]
    hd = C // n_head

    # Causal mask for this q-row tile (hoisted out of the head loop).
    row = lax.broadcasted_iota(jnp.int32, (TQ, T), 0) + qi * TQ
    col = lax.broadcasted_iota(jnp.int32, (TQ, T), 1)
    causal = col <= row

    # Per-head attention; head outputs land directly in static lane slices of the
    # scratch accumulator (no concat / relayout). Contractions on the last dims of
    # q and k (no materialized k transpose).
    # TODO(synk): stream K/V tiles flash-style (skip fully-masked kv tiles) and
    # batch heads into one MXU call for hd < 128.
    for h in range(n_head):
        lo, hi = h * hd, (h + 1) * hd
        qh = q[:, lo:hi]                      # (TQ, hd) bf16
        kh = k[:, lo:hi]                      # (T,  hd) bf16
        vh = v[:, lo:hi]                      # (T,  hd) bf16
        s = lax.dot_general(qh, kh,
                            dimension_numbers=(((1,), (1,)), ((), ())),
                            preferred_element_type=jnp.float32)       # (TQ, T) f32
        s = jnp.where(causal, s, -jnp.inf)
        m = jnp.max(s, axis=-1, keepdims=True)
        p = jnp.exp(s - m)
        denom = jnp.sum(p, axis=-1, keepdims=True)
        p = p * pl.reciprocal(denom, approx=True)                     # EUP divide
        y_scratch[:, lo:hi] = jnp.dot(p.astype(jnp.bfloat16), vh,
                                      preferred_element_type=jnp.float32)

    y = y_scratch[...]                                                # (TQ, C) f32
    attn_out = jnp.dot(y.astype(jnp.bfloat16), wattn_ref[...],
                       preferred_element_type=jnp.float32) + battn_ref[0]
    x1 = x + attn_out                                                 # residual 1

    h2 = _layernorm(x1, ln2w_ref[0], ln2b_ref[0])
    f = jnp.dot(h2.astype(jnp.bfloat16), wfc_ref[...],
                preferred_element_type=jnp.float32) + bfc_ref[0]      # (TQ, 4C) f32
    g = 0.5 * f * (1.0 + jnp.tanh(GELU_C * (f + 0.044715 * f * f * f)))
    m_out = jnp.dot(g.astype(jnp.bfloat16), wmlp_ref[...],
                    preferred_element_type=jnp.float32) + bmlp_ref[0]

    o_ref[0] = x1 + m_out                                             # residual 2


# --------------------------------------------------------------------------- #
# Wrapper
# --------------------------------------------------------------------------- #
def block_forward(x, params, n_head):
    B, T, C = x.shape
    assert C % n_head == 0
    (ln1w, ln1b, wqkv, bqkv, wattn, battn,
     ln2w, ln2b, wfc, bfc, wmlp, bmlp) = params

    # bf16 weights for the MXU (f32 accumulation inside the kernels).
    wqkv_bf = wqkv.astype(jnp.bfloat16)
    wattn_bf = wattn.astype(jnp.bfloat16)
    wfc_bf = wfc.astype(jnp.bfloat16)
    wmlp_bf = wmlp.astype(jnp.bfloat16)

    TQ = _pick_tq(T)
    NT = T // TQ

    tile_map = lambda b, t: (b, t, 0)
    full_seq_map = lambda b, t: (b, 0, 0)    # K/V block resident across q-tile axis
    const2 = lambda b, t: (0, 0)

    cparams = pltpu.CompilerParams(
        dimension_semantics=("parallel", "parallel"),
        vmem_limit_bytes=VMEM_LIMIT_BYTES)

    # --- pass 1: LN1 + c_attn -> q (scaled), k, v in bf16 ---
    q, k, v = pl.pallas_call(
        functools.partial(qkv_kernel, n_head),
        out_shape=(jax.ShapeDtypeStruct((B, T, C), jnp.bfloat16),
                   jax.ShapeDtypeStruct((B, T, C), jnp.bfloat16),
                   jax.ShapeDtypeStruct((B, T, C), jnp.bfloat16)),
        grid=(B, NT),
        in_specs=[
            pl.BlockSpec((1, TQ, C), tile_map),     # x
            pl.BlockSpec((1, C), const2),           # ln1 weight
            pl.BlockSpec((1, C), const2),           # ln1 bias
            pl.BlockSpec((C, 3 * C), const2),       # c_attn weight (bf16)
            pl.BlockSpec((1, 3 * C), const2),       # c_attn bias
        ],
        out_specs=(pl.BlockSpec((1, TQ, C), tile_map),
                   pl.BlockSpec((1, TQ, C), tile_map),
                   pl.BlockSpec((1, TQ, C), tile_map)),
        compiler_params=cparams,
    )(x, ln1w, ln1b, wqkv_bf, bqkv)

    # --- pass 2: attention + proj + residual + LN2 + MLP + residual ---
    out = pl.pallas_call(
        functools.partial(attn_mlp_kernel, n_head),
        out_shape=jax.ShapeDtypeStruct((B, T, C), jnp.float32),
        grid=(B, NT),
        in_specs=[
            pl.BlockSpec((1, TQ, C), tile_map),     # x (q-row tile)
            pl.BlockSpec((1, TQ, C), tile_map),     # q (q-row tile)
            pl.BlockSpec((1, T, C), full_seq_map),  # k (full sequence)
            pl.BlockSpec((1, T, C), full_seq_map),  # v (full sequence)
            pl.BlockSpec((C, C), const2),           # attn c_proj weight (bf16)
            pl.BlockSpec((1, C), const2),           # attn c_proj bias
            pl.BlockSpec((1, C), const2),           # ln2 weight
            pl.BlockSpec((1, C), const2),           # ln2 bias
            pl.BlockSpec((C, 4 * C), const2),       # mlp c_fc weight (bf16)
            pl.BlockSpec((1, 4 * C), const2),       # mlp c_fc bias
            pl.BlockSpec((4 * C, C), const2),       # mlp c_proj weight (bf16)
            pl.BlockSpec((1, C), const2),           # mlp c_proj bias
        ],
        out_specs=pl.BlockSpec((1, TQ, C), tile_map),
        scratch_shapes=[pltpu.VMEM((TQ, C), jnp.float32)],
        compiler_params=cparams,
    )(x, q, k, v, wattn_bf, battn, ln2w, ln2b, wfc_bf, bfc, wmlp_bf, bmlp)

    return out


# --------------------------------------------------------------------------- #
# Pure-JAX f32 reference (matches the PyTorch module)
# --------------------------------------------------------------------------- #
def reference_forward(x, params, n_head):
    (ln1w, ln1b, wqkv, bqkv, wattn, battn,
     ln2w, ln2b, wfc, bfc, wmlp, bmlp) = params
    B, T, C = x.shape
    hd = C // n_head

    def ln(v, w, b):
        mu = jnp.mean(v, axis=-1, keepdims=True)
        var = jnp.mean((v - mu) ** 2, axis=-1, keepdims=True)
        return (v - mu) / jnp.sqrt(var + LN_EPS) * w + b

    h = ln(x, ln1w[0], ln1b[0])
    qkv = h @ wqkv + bqkv[0]
    q, k, v = jnp.split(qkv, 3, axis=-1)
    q = q.reshape(B, T, n_head, hd).transpose(0, 2, 1, 3)
    k = k.reshape(B, T, n_head, hd).transpose(0, 2, 1, 3)
    v = v.reshape(B, T, n_head, hd).transpose(0, 2, 1, 3)
    s = jnp.einsum("bhtd,bhsd->bhts", q, k) / math.sqrt(hd)
    mask = jnp.tril(jnp.ones((T, T), dtype=bool))
    s = jnp.where(mask, s, -jnp.inf)
    p = jax.nn.softmax(s, axis=-1)
    y = jnp.einsum("bhts,bhsd->bhtd", p, v)
    y = y.transpose(0, 2, 1, 3).reshape(B, T, C)
    x1 = x + (y @ wattn + battn[0])

    h2 = ln(x1, ln2w[0], ln2b[0])
    f = h2 @ wfc + bfc[0]
    g = 0.5 * f * (1.0 + jnp.tanh(GELU_C * (f + 0.044715 * f ** 3)))
    return x1 + (g @ wmlp + bmlp[0])


if __name__ == "__main__":
    # Lane-dense small config: B=2, T=256 (block_size), C=128 (n_embd), n_head=4
    # -> TQ=128, grid=(2, 2), hd=32.
    B, T, C, n_head = 2, 256, 128, 4

    key = jax.random.PRNGKey(0)
    keys = jax.random.split(key, 16)

    def rnd(k, shape, scale=0.02):
        return (scale * jax.random.normal(k, shape)).astype(jnp.float32)

    # Parameters (torch nn.Linear weights are (out, in); pre-transposed to (in, out)).
    ln1w = jnp.ones((1, C), jnp.float32)
    ln1b = jnp.zeros((1, C), jnp.float32)
    wqkv = rnd(keys[0], (C, 3 * C))            # c_attn.weight.T
    bqkv = rnd(keys[1], (1, 3 * C))            # c_attn.bias
    wattn = rnd(keys[2], (C, C))               # attn c_proj.weight.T
    battn = rnd(keys[3], (1, C))               # attn c_proj.bias
    ln2w = jnp.ones((1, C), jnp.float32)
    ln2b = jnp.zeros((1, C), jnp.float32)
    wfc = rnd(keys[4], (C, 4 * C))             # mlp.c_fc.weight.T
    bfc = rnd(keys[5], (1, 4 * C))             # mlp.c_fc.bias
    wmlp = rnd(keys[6], (4 * C, C))            # mlp.c_proj.weight.T
    bmlp = rnd(keys[7], (1, C))                # mlp.c_proj.bias

    params = (ln1w, ln1b, wqkv, bqkv, wattn, battn,
              ln2w, ln2b, wfc, bfc, wmlp, bmlp)

    x = jax.random.normal(keys[8], (B, T, C), dtype=jnp.float32)

    out = jax.block_until_ready(block_forward(x, params, n_head))
    ref = jax.block_until_ready(reference_forward(x, params, n_head))

    # bf16 MXU operands (f32 accumulation) vs f32 reference -> relaxed tolerance.
    np.testing.assert_allclose(np.asarray(out), np.asarray(ref),
                               rtol=2e-2, atol=2e-2)

    print("KERNEL_OK")
</pallas_src>

<mosaic_0001>
module attributes {stable_mosaic.version = 11 : i64} {
  func.func @qkv_kernel(%arg0: i32, %arg1: i32, %arg2: memref<1x128x128xf32, #tpu.memory_space<vmem>>, %arg3: memref<1x128xf32, #tpu.memory_space<vmem>>, %arg4: memref<1x128xf32, #tpu.memory_space<vmem>>, %arg5: memref<128x384xbf16, #tpu.memory_space<vmem>>, %arg6: memref<1x384xf32, #tpu.memory_space<vmem>>, %arg7: memref<1x128x128xbf16, #tpu.memory_space<vmem>>, %arg8: memref<1x128x128xbf16, #tpu.memory_space<vmem>>, %arg9: memref<1x128x128xbf16, #tpu.memory_space<vmem>>) attributes {dimension_semantics = [#tpu.dimension_semantics<parallel>, #tpu.dimension_semantics<parallel>], iteration_bounds = array<i64: 2, 2>, scalar_prefetch = 0 : i64, scratch_operands = 0 : i64, tpu.core_type = #tpu.core_type<tc>, window_params = [{transform_indices = @transform_0, window_bounds = array<i64: 1, 128, 128>}, {pipeline_mode = #tpu.pipeline_mode<synchronous>, transform_indices = @transform_1, window_bounds = array<i64: 1, 128>}, {pipeline_mode = #tpu.pipeline_mode<synchronous>, transform_indices = @transform_2, window_bounds = array<i64: 1, 128>}, {pipeline_mode = #tpu.pipeline_mode<synchronous>, transform_indices = @transform_3, window_bounds = array<i64: 128, 384>}, {pipeline_mode = #tpu.pipeline_mode<synchronous>, transform_indices = @transform_4, window_bounds = array<i64: 1, 384>}, {transform_indices = @transform_5, window_bounds = array<i64: 1, 128, 128>}, {transform_indices = @transform_6, window_bounds = array<i64: 1, 128, 128>}, {transform_indices = @transform_7, window_bounds = array<i64: 1, 128, 128>}]} {
    %c0 = arith.constant 0 : index
    %c0_0 = arith.constant 0 : index
    %c0_1 = arith.constant 0 : index
    %0 = vector.load %arg2[%c0, %c0_0, %c0_1] : memref<1x128x128xf32, #tpu.memory_space<vmem>>, vector<1x128x128xf32>
    %1 = vector.shape_cast %0 : vector<1x128x128xf32> to vector<128x128xf32>
    %c0_2 = arith.constant 0 : index
    %c0_3 = arith.constant 0 : index
    %2 = vector.load %arg3[%c0_2, %c0_3] : memref<1x128xf32, #tpu.memory_space<vmem>>, vector<1x128xf32>
    %3 = vector.shape_cast %2 : vector<1x128xf32> to vector<128xf32>
    %c0_4 = arith.constant 0 : index
    %c0_5 = arith.constant 0 : index
    %4 = vector.load %arg4[%c0_4, %c0_5] : memref<1x128xf32, #tpu.memory_space<vmem>>, vector<1x128xf32>
    %5 = vector.shape_cast %4 : vector<1x128xf32> to vector<128xf32>
    %cst = arith.constant dense<0.000000e+00> : vector<128xf32>
    %6 = vector.multi_reduction <add>, %1, %cst [1] : vector<128x128xf32> to vector<128xf32>
    %7 = vector.shape_cast %6 : vector<128xf32> to vector<128x1xf32>
    %cst_6 = arith.constant 1.280000e+02 : f32
    %8 = vector.broadcast %cst_6 : f32 to vector<128x1xf32>
    %9 = arith.divf %7, %8 : vector<128x1xf32>
    %10 = vector.broadcast %9 : vector<128x1xf32> to vector<128x128xf32>
    %11 = arith.subf %1, %10 : vector<128x128xf32>
    %12 = vector.broadcast %9 : vector<128x1xf32> to vector<128x128xf32>
    %13 = arith.subf %1, %12 : vector<128x128xf32>
    %14 = arith.mulf %11, %13 : vector<128x128xf32>
    %cst_7 = arith.constant dense<0.000000e+00> : vector<128xf32>
    %15 = vector.multi_reduction <add>, %14, %cst_7 [1] : vector<128x128xf32> to vector<128xf32>
    %16 = vector.shape_cast %15 : vector<128xf32> to vector<128x1xf32>
    %cst_8 = arith.constant 1.280000e+02 : f32
    %17 = vector.broadcast %cst_8 : f32 to vector<128x1xf32>
    %18 = arith.divf %16, %17 : vector<128x1xf32>
    %19 = vector.broadcast %9 : vector<128x1xf32> to vector<128x128xf32>
    %20 = arith.subf %1, %19 : vector<128x128xf32>
    %cst_9 = arith.constant 9.99999974E-6 : f32
    %21 = vector.broadcast %cst_9 : f32 to vector<128x1xf32>
    %22 = arith.addf %18, %21 : vector<128x1xf32>
    %23 = math.rsqrt %22 : vector<128x1xf32>
    %24 = vector.broadcast %23 : vector<128x1xf32> to vector<128x128xf32>
    %25 = arith.mulf %20, %24 : vector<128x128xf32>
    %26 = vector.shape_cast %3 : vector<128xf32> to vector<1x128xf32>
    %27 = vector.broadcast %26 : vector<1x128xf32> to vector<128x128xf32>
    %28 = arith.mulf %25, %27 : vector<128x128xf32>
    %29 = vector.shape_cast %5 : vector<128xf32> to vector<1x128xf32>
    %30 = vector.broadcast %29 : vector<1x128xf32> to vector<128x128xf32>
    %31 = arith.addf %28, %30 : vector<128x128xf32>
    %32 = arith.truncf %31 : vector<128x128xf32> to vector<128x128xbf16>
    %c0_10 = arith.constant 0 : index
    %c0_11 = arith.constant 0 : index
    %33 = vector.load %arg5[%c0_10, %c0_11] : memref<128x384xbf16, #tpu.memory_space<vmem>>, vector<128x384xbf16>
    %cst_12 = arith.constant dense<0.000000e+00> : vector<128x384xf32>
    %34 = tpu.matmul %32, %33, %cst_12 {dimension_numbers = #tpu.dot_dimension_numbers<[1], [0], [0], [1], [0, 0, 1, 1], [], []>} : vector<128x128xbf16>, vector<128x384xbf16>, vector<128x384xf32> -> vector<128x384xf32>
    %c0_13 = arith.constant 0 : index
    %c0_14 = arith.constant 0 : index
    %35 = vector.load %arg6[%c0_13, %c0_14] : memref<1x384xf32, #tpu.memory_space<vmem>>, vector<1x384xf32>
    %36 = vector.shape_cast %35 : vector<1x384xf32> to vector<384xf32>
    %37 = vector.shape_cast %36 : vector<384xf32> to vector<1x384xf32>
    %38 = vector.broadcast %37 : vector<1x384xf32> to vector<128x384xf32>
    %39 = arith.addf %34, %38 : vector<128x384xf32>
    %40 = vector.extract_strided_slice %39 {offsets = [0, 0], sizes = [128, 128], strides = [1, 1]} : vector<128x384xf32> to vector<128x128xf32>
    %cst_15 = arith.constant 0.176776692 : f32
    %41 = vector.broadcast %cst_15 : f32 to vector<128x128xf32>
    %42 = arith.mulf %40, %41 : vector<128x128xf32>
    %43 = arith.truncf %42 : vector<128x128xf32> to vector<128x128xbf16>
    %c0_16 = arith.constant 0 : index
    %c0_17 = arith.constant 0 : index
    %c0_18 = arith.constant 0 : index
    %44 = vector.load %arg7[%c0_16, %c0_17, %c0_18] : memref<1x128x128xbf16, #tpu.memory_space<vmem>>, vector<1x128x128xbf16>
    %45 = vector.shape_cast %44 : vector<1x128x128xbf16> to vector<128x128xbf16>
    %46 = vector.shape_cast %43 : vector<128x128xbf16> to vector<1x128x128xbf16>
    tpu.vector_store %arg7[%c0_16, %c0_17, %c0_18], %46 {strides = array<i32>} : memref<1x128x128xbf16, #tpu.memory_space<vmem>>, vector<1x128x128xbf16>,
    %47 = vector.extract_strided_slice %39 {offsets = [0, 128], sizes = [128, 128], strides = [1, 1]} : vector<128x384xf32> to vector<128x128xf32>
    %48 = arith.truncf %47 : vector<128x128xf32> to vector<128x128xbf16>
    %c0_19 = arith.constant 0 : index
    %c0_20 = arith.constant 0 : index
    %c0_21 = arith.constant 0 : index
    %49 = vector.load %arg8[%c0_19, %c0_20, %c0_21] : memref<1x128x128xbf16, #tpu.memory_space<vmem>>, vector<1x128x128xbf16>
    %50 = vector.shape_cast %49 : vector<1x128x128xbf16> to vector<128x128xbf16>
    %51 = vector.shape_cast %48 : vector<128x128xbf16> to vector<1x128x128xbf16>
    tpu.vector_store %arg8[%c0_19, %c0_20, %c0_21], %51 {strides = array<i32>} : memref<1x128x128xbf16, #tpu.memory_space<vmem>>, vector<1x128x128xbf16>,
    %52 = vector.extract_strided_slice %39 {offsets = [0, 256], sizes = [128, 128], strides = [1, 1]} : vector<128x384xf32> to vector<128x128xf32>
    %53 = arith.truncf %52 : vector<128x128xf32> to vector<128x128xbf16>
    %c0_22 = arith.constant 0 : index
    %c0_23 = arith.constant 0 : index
    %c0_24 = arith.constant 0 : index
    %54 = vector.load %arg9[%c0_22, %c0_23, %c0_24] : memref<1x128x128xbf16, #tpu.memory_space<vmem>>, vector<1x128x128xbf16>
    %55 = vector.shape_cast %54 : vector<1x128x128xbf16> to vector<128x128xbf16>
    %56 = vector.shape_cast %53 : vector<128x128xbf16> to vector<1x128x128xbf16>
    tpu.vector_store %arg9[%c0_22, %c0_23, %c0_24], %56 {strides = array<i32>} : memref<1x128x128xbf16, #tpu.memory_space<vmem>>, vector<1x128x128xbf16>,
    return
  }
  func.func @transform_0(%arg0: i32, %arg1: i32) -> (i32, i32, i32) {
    %c0_i32 = arith.constant 0 : i32
    %c0_i32_0 = arith.constant 0 : i32
    return %arg0, %arg1, %c0_i32 : i32, i32, i32
  }
  func.func @transform_1(%arg0: i32, %arg1: i32) -> (i32, i32) {
    %c0_i32 = arith.constant 0 : i32
    %c0_i32_0 = arith.constant 0 : i32
    %c0_i32_1 = arith.constant 0 : i32
    return %c0_i32, %c0_i32_0 : i32, i32
  }
  func.func @transform_2(%arg0: i32, %arg1: i32) -> (i32, i32) {
    %c0_i32 = arith.constant 0 : i32
    %c0_i32_0 = arith.constant 0 : i32
    %c0_i32_1 = arith.constant 0 : i32
    return %c0_i32, %c0_i32_0 : i32, i32
  }
  func.func @transform_3(%arg0: i32, %arg1: i32) -> (i32, i32) {
    %c0_i32 = arith.constant 0 : i32
    %c0_i32_0 = arith.constant 0 : i32
    %c0_i32_1 = arith.constant 0 : i32
    return %c0_i32, %c0_i32_0 : i32, i32
  }
  func.func @transform_4(%arg0: i32, %arg1: i32) -> (i32, i32) {
    %c0_i32 = arith.constant 0 : i32
    %c0_i32_0 = arith.constant 0 : i32
    %c0_i32_1 = arith.constant 0 : i32
    return %c0_i32, %c0_i32_0 : i32, i32
  }
  func.func @transform_5(%arg0: i32, %arg1: i32) -> (i32, i32, i32) {
    %c0_i32 = arith.constant 0 : i32
    %c0_i32_0 = arith.constant 0 : i32
    return %arg0, %arg1, %c0_i32 : i32, i32, i32
  }
  func.func @transform_6(%arg0: i32, %arg1: i32) -> (i32, i32, i32) {
    %c0_i32 = arith.constant 0 : i32
    %c0_i32_0 = arith.constant 0 : i32
    return %arg0, %arg1, %c0_i32 : i32, i32, i32
  }
  func.func @transform_7(%arg0: i32, %arg1: i32) -> (i32, i32, i32) {
    %c0_i32 = arith.constant 0 : i32
    %c0_i32_0 = arith.constant 0 : i32
    return %arg0, %arg1, %c0_i32 : i32, i32, i32
  }
}

</mosaic_0001>

<llo_original>
// kernel: tpu_custom_call.1
$region0: #{tpu_custom_call.1}
  #allocation0 [shape = 'u32[]', space=smem, size = 0x4, offset = 0x4, fixed_abs, tag = 'smem constant byte address 0x4 - core index']
  #allocation1 [shape = 'u32[144,128]{1,0:T(1,128)}', space=vmem, size = 0x12000, scoped, tag = 'internal scratch']
  %s0 = inlined_call_operand.hbm [shape: f32[2,256,128], index: 0, kind: input, shape index: {}]
  %s1 = inlined_call_operand.vmem [shape: f32[1,128], index: 1, kind: input, shape index: {}]
  %s2 = inlined_call_operand.vmem [shape: f32[1,128], index: 2, kind: input, shape index: {}]
  %s3 = inlined_call_operand.hbm [shape: bf16[128,384], index: 3, kind: input, shape index: {}]
  %s4 = inlined_call_operand.vmem [shape: f32[1,384], index: 4, kind: input, shape index: {}]
  %s5 = inlined_call_operand.hbm [shape: bf16[2,256,128], index: 5, kind: output, shape index: {0}]
  %s6 = inlined_call_operand.hbm [shape: bf16[2,256,128], index: 6, kind: output, shape index: {1}]
  %s7 = inlined_call_operand.hbm [shape: bf16[2,256,128], index: 7, kind: output, shape index: {2}]
  %8 = xla_tuple %s5, %s6, %s7
  %s9 = sld [smem:[#allocation0]]
  $region77: #{tpu_custom_call.1} parent=0
    _
  %s11 = ssub.s32 1, %s9
  %s12 = scalar_select 0, %s11, %s9
  $region1: #{tpu_custom_call.1} parent=0
    #allocation2 [shape = 'u8[131072]{0}', space=vmem, size = 0x20000, scoped, tag = 'input window, operand 0']
    #allocation3 [shape = 's32[2]{0}', space=sflag, size = 0x8, scoped, tag = 'scoped memory for tpu_custom_call.1']
    #allocation4 [shape = 's32[2]{0}', space=sflag, size = 0x8, scoped, tag = 'scoped memory for tpu_custom_call.1']
    #allocation5 [shape = 'u8[98304]{0}', space=vmem, size = 0x18000, scoped, tag = 'input window, operand 3, single buffered']
    #allocation6 [shape = 's32[1]{0}', space=sflag, size = 0x4, scoped, tag = 'scoped memory for tpu_custom_call.1']
    #allocation7 [shape = 'u8[65536]{0}', space=vmem, size = 0x10000, scoped, tag = 'output window, operand 0']
    #allocation8 [shape = 'u8[65536]{0}', space=vmem, size = 0x10000, scoped, tag = 'output window, operand 1']
    #allocation9 [shape = 's32[2]{0}', space=sflag, size = 0x8, scoped, tag = 'scoped memory for tpu_custom_call.1']
    #allocation10 [shape = 'u8[65536]{0}', space=vmem, size = 0x10000, scoped, tag = 'output window, operand 2']
    %13 = vsyncpa [#allocation3], 0
    %s14 = scalar_lea.sflag [#allocation3], 1
    %15 = vsyncpa %s14, 0
    %16 = vsyncpa [#allocation6], 0
    %17 = vsyncpa [#allocation4], 0
    %s18 = scalar_lea.sflag [#allocation4], 1
    %19 = vsyncpa %s18, 0
    %20 = vsyncpa [#allocation9], 0
    %s21 = scalar_lea.sflag [#allocation9], 1
    %22 = vsyncpa %s21, 0
    loop: start=0, step=1, limit=6
    $region2: #{tpu_custom_call.1} parent=1 // loop_pre_header
      _
    $region3: #{tpu_custom_call.1} parent=1 // loop_header
      %s24 = sphi 0, %s28
      %p25 = scmp.ge.s32.totalorder %s24, 6
      %s31 = sphi 0, %s43
      %s32 = sphi 0, %s39
      %s33 = sphi 0, %s31
      %s34 = sphi 0, %s32
      %s35 = sphi 0, %s33
      %s36 = sphi 0, %s34
      %s48 = sphi 0, %s50
      %s51 = sphi 0, %s48
      %s52 = sphi 0, %s51
      %s68 = sphi 0, %s52
      %s72 = sphi 0, %s72
      %s74 = sphi 0, %s72
      %s75 = sphi 0, %s74
      %s89 = sphi 0, %s75
      %s93 = sphi 0, %s93
      %s95 = sphi 0, %s93
      %s96 = sphi 0, %s95
      %s110 = sphi 0, %s96
      %s114 = sphi 0, %s114
      %s116 = sphi 0, %s114
      %s117 = sphi 0, %s116
      %s131 = sphi 0, %s117
      %s135 = sphi 0, %s135
      %s137 = sphi 0, %s135
      %s138 = sphi 0, %s137
      %s152 = sphi 0, %s138
      %s160 = sphi 0, %s162
      %s163 = sphi 0, %s160
      %s164 = sphi 0, %s163
      %s180 = sphi 0, %s164
      %s188 = sphi 0, %s190
      %s191 = sphi 0, %s188
      %s192 = sphi 0, %s191
      %s208 = sphi 0, %s192
      %s216 = sphi 0, %s218
      %s219 = sphi 0, %s216
      %s220 = sphi 0, %s219
      %s236 = sphi 0, %s220
    $region4: #{tpu_custom_call.1} parent=1 // loop_header_branch
      %27 = sbr.rel (%p25) target = $region8
    $region5: #{tpu_custom_call.1} parent=1 // loop_body
      %s29 = ssub.s32 %s24, 1
      %s30 = ssub.s32 %s24, 2
      %s37 = sadd.s32 1, %s32
      %p38 = scmp.ge.s32.totalorder %s37, 2
      %s39 = scalar_select %p38, 0, %s37
      %s40 = sadd.s32 1, %s31
      %s41 = scalar_select %p38, %s40, %s31
      %p42 = scmp.ge.s32.totalorder %s41, 2
      %s43 = scalar_select %p42, 0, %s41
      %s44 = ssub.s32 %s31, %s43
      %s45 = ssub.s32 %s32, %s39
      %s46 = sor.u32 %s44, %s45
      %p47 = scmp.eq.s32.totalorder %s46, 0
      %s49 = sadd.s32 %s48, 1
      %s50 = scalar_select %p47, %s48, %s49
      %p53 = pneg %p47
      %p54 = scmp.eq.s32.totalorder %s24, 3
      %p55 = por %p53, %p54
      %p56 = scmp.ne.s32.totalorder %s48, %s51
      %p57 = scmp.eq.s32.totalorder %s24, 0
      %p58 = por %p56, %p57
      %p59 = scmp.ne.s32.totalorder %s48, %s51
      %p60 = scmp.eq.s32.totalorder %s29, 3
      %p61 = por %p59, %p60
      %p62 = scmp.ne.s32.totalorder %s51, %s52
      %p63 = scmp.eq.s32.totalorder %s29, 0
      %p64 = por %p62, %p63
      %p65 = scmp.ne.s32.totalorder %s51, %s52
      %p66 = scmp.eq.s32.totalorder %s30, 3
      %p67 = por %p65, %p66
      %p69 = scmp.ne.s32.totalorder %s52, %s68
      %p70 = scmp.eq.s32.totalorder %s30, 0
      %p71 = por %p69, %p70
      %s73 = sadd.s32 %s72, 1
      %p76 = scmp.eq.s32.totalorder %s24, 3
      %p77 = scmp.ne.s32.totalorder %s72, %s74
      %p78 = scmp.eq.s32.totalorder %s24, 0
      %p79 = por %p77, %p78
      %p80 = scmp.ne.s32.totalorder %s72, %s74
      %p81 = scmp.eq.s32.totalorder %s29, 3
      %p82 = por %p80, %p81
      %p83 = scmp.ne.s32.totalorder %s74, %s75
      %p84 = scmp.eq.s32.totalorder %s29, 0
      %p85 = por %p83, %p84
      %p86 = scmp.ne.s32.totalorder %s74, %s75
      %p87 = scmp.eq.s32.totalorder %s30, 3
      %p88 = por %p86, %p87
      %p90 = scmp.ne.s32.totalorder %s75, %s89
      %p91 = scmp.eq.s32.totalorder %s30, 0
      %p92 = por %p90, %p91
      %s94 = sadd.s32 %s93, 1
      %p97 = scmp.eq.s32.totalorder %s24, 3
      %p98 = scmp.ne.s32.totalorder %s93, %s95
      %p99 = scmp.eq.s32.totalorder %s24, 0
      %p100 = por %p98, %p99
      %p101 = scmp.ne.s32.totalorder %s93, %s95
      %p102 = scmp.eq.s32.totalorder %s29, 3
      %p103 = por %p101, %p102
      %p104 = scmp.ne.s32.totalorder %s95, %s96
      %p105 = scmp.eq.s32.totalorder %s29, 0
      %p106 = por %p104, %p105
      %p107 = scmp.ne.s32.totalorder %s95, %s96
      %p108 = scmp.eq.s32.totalorder %s30, 3
      %p109 = por %p107, %p108
      %p111 = scmp.ne.s32.totalorder %s96, %s110
      %p112 = scmp.eq.s32.totalorder %s30, 0
      %p113 = por %p111, %p112
      %s115 = sadd.s32 %s114, 1
      %p118 = scmp.eq.s32.totalorder %s24, 3
      %p119 = scmp.ne.s32.totalorder %s114, %s116
      %p120 = scmp.eq.s32.totalorder %s24, 0
      %p121 = por %p119, %p120
      %p122 = scmp.ne.s32.totalorder %s114, %s116
      %p123 = scmp.eq.s32.totalorder %s29, 3
      %p124 = por %p122, %p123
      %p125 = scmp.ne.s32.totalorder %s116, %s117
      %p126 = scmp.eq.s32.totalorder %s29, 0
      %p127 = por %p125, %p126
      %p128 = scmp.ne.s32.totalorder %s116, %s117
      %p129 = scmp.eq.s32.totalorder %s30, 3
      %p130 = por %p128, %p129
      %p132 = scmp.ne.s32.totalorder %s117, %s131
      %p133 = scmp.eq.s32.totalorder %s30, 0
      %p134 = por %p132, %p133
      %s136 = sadd.s32 %s135, 1
      %p139 = scmp.eq.s32.totalorder %s24, 3
      %p140 = scmp.ne.s32.totalorder %s135, %s137
      %p141 = scmp.eq.s32.totalorder %s24, 0
      %p142 = por %p140, %p141
      %p143 = scmp.ne.s32.totalorder %s135, %s137
      %p144 = scmp.eq.s32.totalorder %s29, 3
      %p145 = por %p143, %p144
      %p146 = scmp.ne.s32.totalorder %s137, %s138
      %p147 = scmp.eq.s32.totalorder %s29, 0
      %p148 = por %p146, %p147
      %p149 = scmp.ne.s32.totalorder %s137, %s138
      %p150 = scmp.eq.s32.totalorder %s30, 3
      %p151 = por %p149, %p150
      %p153 = scmp.ne.s32.totalorder %s138, %s152
      %p154 = scmp.eq.s32.totalorder %s30, 0
      %p155 = por %p153, %p154
      %s156 = ssub.s32 %s31, %s43
      %s157 = ssub.s32 %s32, %s39
      %s158 = sor.u32 %s156, %s157
      %p159 = scmp.eq.s32.totalorder %s158, 0
      %s161 = sadd.s32 %s160, 1
      %s162 = scalar_select %p159, %s160, %s161
      %p165 = pneg %p159
      %p166 = scmp.eq.s32.totalorder %s24, 3
      %p167 = por %p165, %p166
      %p168 = scmp.ne.s32.totalorder %s160, %s163
      %p169 = scmp.eq.s32.totalorder %s24, 0
      %p170 = por %p168, %p169
      %p171 = scmp.ne.s32.totalorder %s160, %s163
      %p172 = scmp.eq.s32.totalorder %s29, 3
      %p173 = por %p171, %p172
      %p174 = scmp.ne.s32.totalorder %s163, %s164
      %p175 = scmp.eq.s32.totalorder %s29, 0
      %p176 = por %p174, %p175
      %p177 = scmp.ne.s32.totalorder %s163, %s164
      %p178 = scmp.eq.s32.totalorder %s30, 3
      %p179 = por %p177, %p178
      %p181 = scmp.ne.s32.totalorder %s164, %s180
      %p182 = scmp.eq.s32.totalorder %s30, 0
      %p183 = por %p181, %p182
      %s184 = ssub.s32 %s31, %s43
      %s185 = ssub.s32 %s32, %s39
      %s186 = sor.u32 %s184, %s185
      %p187 = scmp.eq.s32.totalorder %s186, 0
      %s189 = sadd.s32 %s188, 1
      %s190 = scalar_select %p187, %s188, %s189
      %p193 = pneg %p187
      %p194 = scmp.eq.s32.totalorder %s24, 3
      %p195 = por %p193, %p194
      %p196 = scmp.ne.s32.totalorder %s188, %s191
      %p197 = scmp.eq.s32.totalorder %s24, 0
      %p198 = por %p196, %p197
      %p199 = scmp.ne.s32.totalorder %s188, %s191
      %p200 = scmp.eq.s32.totalorder %s29, 3
      %p201 = por %p199, %p200
      %p202 = scmp.ne.s32.totalorder %s191, %s192
      %p203 = scmp.eq.s32.totalorder %s29, 0
      %p204 = por %p202, %p203
      %p205 = scmp.ne.s32.totalorder %s191, %s192
      %p206 = scmp.eq.s32.totalorder %s30, 3
      %p207 = por %p205, %p206
      %p209 = scmp.ne.s32.totalorder %s192, %s208
      %p210 = scmp.eq.s32.totalorder %s30, 0
      %p211 = por %p209, %p210
      %s212 = ssub.s32 %s31, %s43
      %s213 = ssub.s32 %s32, %s39
      %s214 = sor.u32 %s212, %s213
      %p215 = scmp.eq.s32.totalorder %s214, 0
      %s217 = sadd.s32 %s216, 1
      %s218 = scalar_select %p215, %s216, %s217
      %p221 = pneg %p215
      %p222 = scmp.eq.s32.totalorder %s24, 3
      %p223 = por %p221, %p222
      %p224 = scmp.ne.s32.totalorder %s216, %s219
      %p225 = scmp.eq.s32.totalorder %s24, 0
      %p226 = por %p224, %p225
      %p227 = scmp.ne.s32.totalorder %s216, %s219
      %p228 = scmp.eq.s32.totalorder %s29, 3
      %p229 = por %p227, %p228
      %p230 = scmp.ne.s32.totalorder %s219, %s220
      %p231 = scmp.eq.s32.totalorder %s29, 0
      %p232 = por %p230, %p231
      %p233 = scmp.ne.s32.totalorder %s219, %s220
      %p234 = scmp.eq.s32.totalorder %s30, 3
      %p235 = por %p233, %p234
      %p237 = scmp.ne.s32.totalorder %s220, %s236
      %p238 = scmp.eq.s32.totalorder %s30, 0
      %p239 = por %p237, %p238
      %p240 = scmp.le.s32.totalorder 1, %s24
      %p241 = scmp.lt.s32.totalorder %s24, 5
      %p242 = pnand %p240, %p241
      %p243 = pneg %p242
      // Predicated region
      $region9: #{tpu_custom_call.1} parent=5 // pred_check
        _
      $region10: #{tpu_custom_call.1} parent=5 // pred_check_branch
        %245 = sbr.rel (%p242) target = $region12
      $region11: #{tpu_custom_call.1} parent=5 // pred_region
        %s246 = ssub.s32 %s24, 1
        // Predicated region
        $region13: #{tpu_custom_call.1} parent=11 // pred_check
          %p247 = pneg %p85
        $region14: #{tpu_custom_call.1} parent=11 // pred_check_branch
          %249 = sbr.rel (%p247) target = $region16
        $region15: #{tpu_custom_call.1} parent=11 // pred_region
          _
        $region16: #{tpu_custom_call.1} parent=11 // pred_fallthru
          _
        // Predicated region
        $region17: #{tpu_custom_call.1} parent=11 // pred_check
          %p250 = pneg %p106
        $region18: #{tpu_custom_call.1} parent=11 // pred_check_branch
          %252 = sbr.rel (%p250) target = $region20
        $region19: #{tpu_custom_call.1} parent=11 // pred_region
          _
        $region20: #{tpu_custom_call.1} parent=11 // pred_fallthru
          _
        // Predicated region
        $region21: #{tpu_custom_call.1} parent=11 // pred_check
          %p253 = pneg %p127
        $region22: #{tpu_custom_call.1} parent=11 // pred_check_branch
          %255 = sbr.rel (%p253) target = $region24
        $region23: #{tpu_custom_call.1} parent=11 // pred_region
          %s257 = ssub.s32 3072, 3072
          %258 = vsyncadd [#allocation6], %s257
          %s259 = sshll.u32 [#allocation5], 4
          %s260 = int_to_ptr.vmem [resolvable:$true] %s259
          %265 = dma.hbm_to_vmem [thread:$0]  %s3, 3072, %s260, [#allocation6], 192, 192, 12
        $region24: #{tpu_custom_call.1} parent=11 // pred_fallthru
          _
        // Predicated region
        $region25: #{tpu_custom_call.1} parent=11 // pred_check
          %p266 = pneg %p148
        $region26: #{tpu_custom_call.1} parent=11 // pred_check_branch
          %268 = sbr.rel (%p266) target = $region28
        $region27: #{tpu_custom_call.1} parent=11 // pred_region
          _
        $region28: #{tpu_custom_call.1} parent=11 // pred_fallthru
          _
      $region12: #{tpu_custom_call.1} parent=5 // pred_fallthru
        _
      %p269 = scmp.lt.s32.totalorder %s24, 4
      // Predicated region
      $region29: #{tpu_custom_call.1} parent=5 // pred_check
        %p270 = pneg %p269
      $region30: #{tpu_custom_call.1} parent=5 // pred_check_branch
        %272 = sbr.rel (%p270) target = $region32
      $region31: #{tpu_custom_call.1} parent=5 // pred_region
        // Predicated region
        $region33: #{tpu_custom_call.1} parent=31 // pred_check
          %p273 = pneg %p58
        $region34: #{tpu_custom_call.1} parent=31 // pred_check_branch
          %275 = sbr.rel (%p273) target = $region36
        $region35: #{tpu_custom_call.1} parent=31 // pred_region
          %s276 = sand.u32 %s48, 1
          %s277 = scalar_lea.sflag [#allocation3], %s276
          %s278 = sand.u32 %s48, 1
          %s279 = smul.addr %s278, 128
          %s280 = scalar_lea.vmem [#allocation2], %s279
          %s281 = smul.u32 16, %s32
          %s283 = ssub.s32 2048, 2048
          %284 = vsyncadd %s277, %s283
          %s285 = smul.addr %s31, 32
          %s286 = sadd.s32 %s281, %s285
          %s287 = smul.addr %s286, 128
          %s288 = scalar_lea.hbm %s0, %s287
          %s289 = sshll.u32 %s280, 4
          %s290 = int_to_ptr.vmem [resolvable:$true] %s289
          %295 = dma.hbm_to_vmem [thread:$0]  %s288, 2048, %s290, %s277, 128, 128, 8
        $region36: #{tpu_custom_call.1} parent=31 // pred_fallthru
          _
      $region32: #{tpu_custom_call.1} parent=5 // pred_fallthru
        _
      %p296 = scmp.le.s32.totalorder 1, %s24
      %p297 = scmp.lt.s32.totalorder %s24, 5
      %p298 = pnand %p296, %p297
      %p299 = pneg %p298
      // Predicated region
      $region37: #{tpu_custom_call.1} parent=5 // pred_check
        _
      $region38: #{tpu_custom_call.1} parent=5 // pred_check_branch
        %301 = sbr.rel (%p298) target = $region40
      $region39: #{tpu_custom_call.1} parent=5 // pred_region
        %s302 = ssub.s32 %s24, 1
        %s303 = sand.u32 %s51, 1
        %s304 = scalar_lea.sflag [#allocation3], %s303
        %s305 = sand.u32 %s51, 1
        %s306 = smul.addr %s305, 128
        %s307 = scalar_lea.vmem [#allocation2], %s306
        // Predicated region
        $region41: #{tpu_custom_call.1} parent=39 // pred_check
          %p308 = pneg %p64
        $region42: #{tpu_custom_call.1} parent=39 // pred_check_branch
          %310 = sbr.rel (%p308) target = $region44
        $region43: #{tpu_custom_call.1} parent=39 // pred_region
          %311 = dma.done %s304, 2048
        $region44: #{tpu_custom_call.1} parent=39 // pred_fallthru
          _
        // Predicated region
        $region45: #{tpu_custom_call.1} parent=39 // pred_check
          %p312 = pneg %p127
        $region46: #{tpu_custom_call.1} parent=39 // pred_check_branch
          %314 = sbr.rel (%p312) target = $region48
        $region47: #{tpu_custom_call.1} parent=39 // pred_region
          %315 = dma.done [#allocation6], 3072
        $region48: #{tpu_custom_call.1} parent=39 // pred_fallthru
          _
        %s316 = sand.u32 %s51, 1
        %s317 = scalar_lea.sflag [#allocation3], %s316
        %s318 = sand.u32 %s51, 1
        %s319 = smul.addr %s318, 128
        %s320 = scalar_lea.vmem [#allocation2], %s319
        %p321 = pneg %p64
        %p322 = pneg %p61
        %p323 = pneg %p85
        %p324 = pneg %p82
        %p325 = pneg %p106
        %p326 = pneg %p103
        %p327 = pneg %p127
        %p328 = pneg %p124
        %p329 = pneg %p148
        %p330 = pneg %p145
        %p331 = pneg %p176
        %p332 = pneg %p173
        %s333 = sand.u32 %s163, 1
        %s334 = scalar_lea.sflag [#allocation4], %s333
        %s335 = sand.u32 %s163, 1
        %s336 = smul.addr %s335, 64
        %s337 = scalar_lea.vmem [#allocation7], %s336
        %p338 = pneg %p204
        %p339 = pneg %p201
        %s340 = sand.u32 %s29, 1
        %s341 = scalar_lea.sflag [#allocation9], %s340
        %s342 = sand.u32 %s191, 1
        %s343 = smul.addr %s342, 64
        %s344 = scalar_lea.vmem [#allocation8], %s343
        %p345 = pneg %p232
        %p346 = pneg %p229
        %s347 = sand.u32 %s29, 1
        %s348 = scalar_lea.sflag [#allocation9], %s347
        %s349 = sand.u32 %s219, 1
        %s350 = smul.addr %s349, 64
        %s351 = scalar_lea.vmem [#allocation10], %s350
        %s352 = smul.u32 16, %s34
        %s353 = smul.u32 16, %s34
        %s354 = smul.u32 16, %s34
        %s355 = smul.u32 16, %s34
        %v357 = vld [vmem:[%s307] sm:$0xff]
        %v358 = vld [vmem:[%s307 + $0x8] sm:$0xff]
        %v359 = vld [vmem:[%s307 + $0x10] sm:$0xff]
        %v360 = vld [vmem:[%s307 + $0x18] sm:$0xff]
        %v361 = vld [vmem:[%s307 + $0x20] sm:$0xff]
        %v362 = vld [vmem:[%s307 + $0x28] sm:$0xff]
        %v363 = vld [vmem:[%s307 + $0x30] sm:$0xff]
        %v364 = vld [vmem:[%s307 + $0x38] sm:$0xff]
        %v365 = vld [vmem:[%s307 + $0x40] sm:$0xff]
        %v366 = vld [vmem:[%s307 + $0x48] sm:$0xff]
        %v367 = vld [vmem:[%s307 + $0x50] sm:$0xff]
        %v368 = vld [vmem:[%s307 + $0x58] sm:$0xff]
        %v369 = vld [vmem:[%s307 + $0x60] sm:$0xff]
        %v370 = vld [vmem:[%s307 + $0x68] sm:$0xff]
        %v371 = vld [vmem:[%s307 + $0x70] sm:$0xff]
        %v372 = vld [vmem:[%s307 + $0x78] sm:$0xff]
        %v373 = vld [vmem:[%s1] sm:$0x1]
        %v374 = vld [vmem:[%s2] sm:$0x1]
        %375 = vadd.xlane.f32.xlu0 %v357
        %v376 = vpop.xlane.xlu0 %375
        %377 = vadd.xlane.f32.xlu0 %v358
        %v378 = vpop.xlane.xlu0 %377
        %379 = vadd.xlane.f32.xlu0 %v359
        %v380 = vpop.xlane.xlu0 %379
        %381 = vadd.xlane.f32.xlu0 %v360
        %v382 = vpop.xlane.xlu0 %381
        %383 = vadd.xlane.f32.xlu0 %v361
        %v384 = vpop.xlane.xlu0 %383
        %385 = vadd.xlane.f32.xlu0 %v362
        %v386 = vpop.xlane.xlu0 %385
        %387 = vadd.xlane.f32.xlu0 %v363
        %v388 = vpop.xlane.xlu0 %387
        %389 = vadd.xlane.f32.xlu0 %v364
        %v390 = vpop.xlane.xlu0 %389
        %391 = vadd.xlane.f32.xlu0 %v365
        %v392 = vpop.xlane.xlu0 %391
        %393 = vadd.xlane.f32.xlu0 %v366
        %v394 = vpop.xlane.xlu0 %393
        %395 = vadd.xlane.f32.xlu0 %v367
        %v396 = vpop.xlane.xlu0 %395
        %397 = vadd.xlane.f32.xlu0 %v368
        %v398 = vpop.xlane.xlu0 %397
        %399 = vadd.xlane.f32.xlu0 %v369
        %v400 = vpop.xlane.xlu0 %399
        %401 = vadd.xlane.f32.xlu0 %v370
        %v402 = vpop.xlane.xlu0 %401
        %403 = vadd.xlane.f32.xlu0 %v371
        %v404 = vpop.xlane.xlu0 %403
        %405 = vadd.xlane.f32.xlu0 %v372
        %v406 = vpop.xlane.xlu0 %405
        %v407 = vrcp.pop 128.0
        %v408 = vmul.f32 %v376, %v407
        %v409 = vmul.f32 %v378, %v407
        %v410 = vmul.f32 %v380, %v407
        %v411 = vmul.f32 %v382, %v407
        %v412 = vmul.f32 %v384, %v407
        %v413 = vmul.f32 %v386, %v407
        %v414 = vmul.f32 %v388, %v407
        %v415 = vmul.f32 %v390, %v407
        %v416 = vmul.f32 %v392, %v407
        %v417 = vmul.f32 %v394, %v407
        %v418 = vmul.f32 %v396, %v407
        %v419 = vmul.f32 %v398, %v407
        %v420 = vmul.f32 %v400, %v407
        %v421 = vmul.f32 %v402, %v407
        %v422 = vmul.f32 %v404, %v407
        %v423 = vmul.f32 %v406, %v407
        %v424 = vsub.f32 %v357, %v408
        %v425 = vsub.f32 %v358, %v409
        %v426 = vsub.f32 %v359, %v410
        %v427 = vsub.f32 %v360, %v411
        %v428 = vsub.f32 %v361, %v412
        %v429 = vsub.f32 %v362, %v413
        %v430 = vsub.f32 %v363, %v414
        %v431 = vsub.f32 %v364, %v415
        %v432 = vsub.f32 %v365, %v416
        %v433 = vsub.f32 %v366, %v417
        %v434 = vsub.f32 %v367, %v418
        %v435 = vsub.f32 %v368, %v419
        %v436 = vsub.f32 %v369, %v420
        %v437 = vsub.f32 %v370, %v421
        %v438 = vsub.f32 %v371, %v422
        %v439 = vsub.f32 %v372, %v423
        %v440 = vmul.f32 %v424, %v424
        %v441 = vmul.f32 %v425, %v425
        %v442 = vmul.f32 %v426, %v426
        %v443 = vmul.f32 %v427, %v427
        %v444 = vmul.f32 %v428, %v428
        %v445 = vmul.f32 %v429, %v429
        %v446 = vmul.f32 %v430, %v430
        %v447 = vmul.f32 %v431, %v431
        %v448 = vmul.f32 %v432, %v432
        %v449 = vmul.f32 %v433, %v433
        %v450 = vmul.f32 %v434, %v434
        %v451 = vmul.f32 %v435, %v435
        %v452 = vmul.f32 %v436, %v436
        %v453 = vmul.f32 %v437, %v437
        %v454 = vmul.f32 %v438, %v438
        %v455 = vmul.f32 %v439, %v439
        %456 = vadd.xlane.f32.xlu0 %v440
        %v457 = vpop.xlane.xlu0 %456
        %458 = vadd.xlane.f32.xlu0 %v441
        %v459 = vpop.xlane.xlu0 %458
        %460 = vadd.xlane.f32.xlu0 %v442
        %v461 = vpop.xlane.xlu0 %460
        %462 = vadd.xlane.f32.xlu0 %v443
        %v463 = vpop.xlane.xlu0 %462
        %464 = vadd.xlane.f32.xlu0 %v444
        %v465 = vpop.xlane.xlu0 %464
        %466 = vadd.xlane.f32.xlu0 %v445
        %v467 = vpop.xlane.xlu0 %466
        %468 = vadd.xlane.f32.xlu0 %v446
        %v469 = vpop.xlane.xlu0 %468
        %470 = vadd.xlane.f32.xlu0 %v447
        %v471 = vpop.xlane.xlu0 %470
        %472 = vadd.xlane.f32.xlu0 %v448
        %v473 = vpop.xlane.xlu0 %472
        %474 = vadd.xlane.f32.xlu0 %v449
        %v475 = vpop.xlane.xlu0 %474
        %476 = vadd.xlane.f32.xlu0 %v450
        %v477 = vpop.xlane.xlu0 %476
        %478 = vadd.xlane.f32.xlu0 %v451
        %v479 = vpop.xlane.xlu0 %478
        %480 = vadd.xlane.f32.xlu0 %v452
        %v481 = vpop.xlane.xlu0 %480
        %482 = vadd.xlane.f32.xlu0 %v453
        %v483 = vpop.xlane.xlu0 %482
        %484 = vadd.xlane.f32.xlu0 %v454
        %v485 = vpop.xlane.xlu0 %484
        %486 = vadd.xlane.f32.xlu0 %v455
        %v487 = vpop.xlane.xlu0 %486
        %v488 = vmul.f32 %v457, %v407
        %v489 = vmul.f32 %v459, %v407
        %v490 = vmul.f32 %v461, %v407
        %v491 = vmul.f32 %v463, %v407
        %v492 = vmul.f32 %v465, %v407
        %v493 = vmul.f32 %v467, %v407
        %v494 = vmul.f32 %v469, %v407
        %v495 = vmul.f32 %v471, %v407
        %v496 = vmul.f32 %v473, %v407
        %v497 = vmul.f32 %v475, %v407
        %v498 = vmul.f32 %v477, %v407
        %v499 = vmul.f32 %v479, %v407
        %v500 = vmul.f32 %v481, %v407
        %v501 = vmul.f32 %v483, %v407
        %v502 = vmul.f32 %v485, %v407
        %v503 = vmul.f32 %v487, %v407
        %v504 = vadd.f32 %v488, 1e-05
        %v505 = vadd.f32 %v489, 1e-05
        %v506 = vadd.f32 %v490, 1e-05
        %v507 = vadd.f32 %v491, 1e-05
        %v508 = vadd.f32 %v492, 1e-05
        %v509 = vadd.f32 %v493, 1e-05
        %v510 = vadd.f32 %v494, 1e-05
        %v511 = vadd.f32 %v495, 1e-05
        %v512 = vadd.f32 %v496, 1e-05
        %v513 = vadd.f32 %v497, 1e-05
        %v514 = vadd.f32 %v498, 1e-05
        %v515 = vadd.f32 %v499, 1e-05
        %v516 = vadd.f32 %v500, 1e-05
        %v517 = vadd.f32 %v501, 1e-05
        %v518 = vadd.f32 %v502, 1e-05
        %v519 = vadd.f32 %v503, 1e-05
        %v520 = vrsqrt.pop %v504
        %v521 = vrsqrt.pop %v505
        %v522 = vrsqrt.pop %v506
        %v523 = vrsqrt.pop %v507
        %v524 = vrsqrt.pop %v508
        %v525 = vrsqrt.pop %v509
        %v526 = vrsqrt.pop %v510
        %v527 = vrsqrt.pop %v511
        %v528 = vrsqrt.pop %v512
        %v529 = vrsqrt.pop %v513
        %v530 = vrsqrt.pop %v514
        %v531 = vrsqrt.pop %v515
        %v532 = vrsqrt.pop %v516
        %v533 = vrsqrt.pop %v517
        %v534 = vrsqrt.pop %v518
        %v535 = vrsqrt.pop %v519
        %v536 = vmul.f32 %v424, %v520
        %v537 = vmul.f32 %v425, %v521
        %v538 = vmul.f32 %v426, %v522
        %v539 = vmul.f32 %v427, %v523
        %v540 = vmul.f32 %v428, %v524
        %v541 = vmul.f32 %v429, %v525
        %v542 = vmul.f32 %v430, %v526
        %v543 = vmul.f32 %v431, %v527
        %v544 = vmul.f32 %v432, %v528
        %v545 = vmul.f32 %v433, %v529
        %v546 = vmul.f32 %v434, %v530
        %v547 = vmul.f32 %v435, %v531
        %v548 = vmul.f32 %v436, %v532
        %v549 = vmul.f32 %v437, %v533
        %v550 = vmul.f32 %v438, %v534
        %v551 = vmul.f32 %v439, %v535
        %v553 = vlaneseq
        %v554 = vshrl.u32 %v553, 7
        %v555 = vsub.s32 0, %v554
        %v556 = vrot.slane %v373, %v555
        %v558 = vmul.f32 %v536, %v556
        %v559 = vmul.f32 %v537, %v556
        %v560 = vmul.f32 %v538, %v556
        %v561 = vmul.f32 %v539, %v556
        %v562 = vmul.f32 %v540, %v556
        %v563 = vmul.f32 %v541, %v556
        %v564 = vmul.f32 %v542, %v556
        %v565 = vmul.f32 %v543, %v556
        %v566 = vmul.f32 %v544, %v556
        %v567 = vmul.f32 %v545, %v556
        %v568 = vmul.f32 %v546, %v556
        %v569 = vmul.f32 %v547, %v556
        %v570 = vmul.f32 %v548, %v556
        %v571 = vmul.f32 %v549, %v556
        %v572 = vmul.f32 %v550, %v556
        %v573 = vmul.f32 %v551, %v556
        %v575 = vlaneseq
        %v576 = vshrl.u32 %v575, 7
        %v577 = vsub.s32 0, %v576
        %v578 = vrot.slane %v374, %v577
        %v580 = vadd.f32 %v558, %v578
        %v581 = vadd.f32 %v559, %v578
        %v582 = vadd.f32 %v560, %v578
        %v583 = vadd.f32 %v561, %v578
        %v584 = vadd.f32 %v562, %v578
        %v585 = vadd.f32 %v563, %v578
        %v586 = vadd.f32 %v564, %v578
        %v587 = vadd.f32 %v565, %v578
        %v588 = vadd.f32 %v566, %v578
        %v589 = vadd.f32 %v567, %v578
        %v590 = vadd.f32 %v568, %v578
        %v591 = vadd.f32 %v569, %v578
        %v592 = vadd.f32 %v570, %v578
        %v593 = vadd.f32 %v571, %v578
        %v594 = vadd.f32 %v572, %v578
        %v595 = vadd.f32 %v573, %v578
        %v596 = vpack.c.bf16 %v581, %v580
        %v597 = vpack.c.bf16 %v583, %v582
        %v598 = vpack.c.bf16 %v585, %v584
        %v599 = vpack.c.bf16 %v587, %v586
        %v600 = vpack.c.bf16 %v589, %v588
        %v601 = vpack.c.bf16 %v591, %v590
        %v602 = vpack.c.bf16 %v593, %v592
        %v603 = vpack.c.bf16 %v595, %v594
        %v604 = vld [vmem:[#allocation5] sm:$0xff]
        %v605 = vld [vmem:[#allocation5 + $0x8] sm:$0xf]
        %v606 = vld [vmem:[#allocation5 + $0xc] sm:$0xff]
        %v607 = vld [vmem:[#allocation5 + $0x14] sm:$0xf]
        %v608 = vld [vmem:[#allocation5 + $0x18] sm:$0xff]
        %v609 = vld [vmem:[#allocation5 + $0x20] sm:$0xf]
        %v610 = vld [vmem:[#allocation5 + $0x24] sm:$0xff]
        %v611 = vld [vmem:[#allocation5 + $0x2c] sm:$0xf]
        %v612 = vld [vmem:[#allocation5 + $0x30] sm:$0xff]
        %v613 = vld [vmem:[#allocation5 + $0x38] sm:$0xf]
        %v614 = vld [vmem:[#allocation5 + $0x3c] sm:$0xff]
        %v615 = vld [vmem:[#allocation5 + $0x44] sm:$0xf]
        %v616 = vld [vmem:[#allocation5 + $0x48] sm:$0xff]
        %v617 = vld [vmem:[#allocation5 + $0x50] sm:$0xf]
        %v618 = vld [vmem:[#allocation5 + $0x54] sm:$0xff]
        %v619 = vld [vmem:[#allocation5 + $0x5c] sm:$0xf]
        %v620 = vld [vmem:[#allocation5 + $0x60] sm:$0xff]
        %v621 = vld [vmem:[#allocation5 + $0x68] sm:$0xf]
        %v622 = vld [vmem:[#allocation5 + $0x6c] sm:$0xff]
        %v623 = vld [vmem:[#allocation5 + $0x74] sm:$0xf]
        %v624 = vld [vmem:[#allocation5 + $0x78] sm:$0xff]
        %v625 = vld [vmem:[#allocation5 + $0x80] sm:$0xf]
        %v626 = vld [vmem:[#allocation5 + $0x84] sm:$0xff]
        %v627 = vld [vmem:[#allocation5 + $0x8c] sm:$0xf]
        %v628 = vld [vmem:[#allocation5 + $0x90] sm:$0xff]
        %v629 = vld [vmem:[#allocation5 + $0x98] sm:$0xf]
        %v630 = vld [vmem:[#allocation5 + $0x9c] sm:$0xff]
        %v631 = vld [vmem:[#allocation5 + $0xa4] sm:$0xf]
        %v632 = vld [vmem:[#allocation5 + $0xa8] sm:$0xff]
        %v633 = vld [vmem:[#allocation5 + $0xb0] sm:$0xf]
        %v634 = vld [vmem:[#allocation5 + $0xb4] sm:$0xff]
        %v635 = vld [vmem:[#allocation5 + $0xbc] sm:$0xf]
        %v636 = vld [vmem:[%s4] sm:$0x7]
        %v638 = vlaneseq
        %v639 = vshrl.u32 %v638, 7
        %v640 = vsub.s32 0, %v639
        %v641 = vrot.slane %v636, %v640
        %v642 = vlaneseq
        %v643 = vshrl.u32 %v642, 7
        %v644 = vsub.s32 1, %v643
        %v645 = vrot.slane %v636, %v644
        %v646 = vlaneseq
        %v647 = vshrl.u32 %v646, 7
        %v648 = vsub.s32 2, %v647
        %v649 = vrot.slane %v636, %v648
        %v685 = vunpack.c.l.b16 %v604
        %v686 = vunpack.c.h.b16 %v604
        %v687 = vunpack.c.l.b16 %v605
        %v688 = vunpack.c.l.b16 %v606
        %v689 = vunpack.c.h.b16 %v606
        %v690 = vunpack.c.l.b16 %v607
        %v691 = vunpack.c.l.b16 %v608
        %v692 = vunpack.c.h.b16 %v608
        %v693 = vunpack.c.l.b16 %v609
        %v694 = vunpack.c.l.b16 %v610
        %v695 = vunpack.c.h.b16 %v610
        %v696 = vunpack.c.l.b16 %v611
        %v697 = vunpack.c.l.b16 %v612
        %v698 = vunpack.c.h.b16 %v612
        %v699 = vunpack.c.l.b16 %v613
        %v700 = vunpack.c.l.b16 %v614
        %v701 = vunpack.c.h.b16 %v614
        %v702 = vunpack.c.l.b16 %v615
        %v703 = vunpack.c.l.b16 %v616
        %v704 = vunpack.c.h.b16 %v616
        %v705 = vunpack.c.l.b16 %v617
        %v706 = vunpack.c.l.b16 %v618
        %v707 = vunpack.c.h.b16 %v618
        %v708 = vunpack.c.l.b16 %v619
        %v709 = vunpack.c.l.b16 %v620
        %v710 = vunpack.c.h.b16 %v620
        %v711 = vunpack.c.l.b16 %v621
        %v712 = vunpack.c.l.b16 %v622
        %v713 = vunpack.c.h.b16 %v622
        %v714 = vunpack.c.l.b16 %v623
        %v715 = vunpack.c.l.b16 %v624
        %v716 = vunpack.c.h.b16 %v624
        %v717 = vunpack.c.l.b16 %v625
        %v718 = vunpack.c.l.b16 %v626
        %v719 = vunpack.c.h.b16 %v626
        %v720 = vunpack.c.l.b16 %v627
        %v721 = vunpack.c.l.b16 %v628
        %v722 = vunpack.c.h.b16 %v628
        %v723 = vunpack.c.l.b16 %v629
        %v724 = vunpack.c.l.b16 %v630
        %v725 = vunpack.c.h.b16 %v630
        %v726 = vunpack.c.l.b16 %v631
        %v727 = vunpack.c.l.b16 %v632
        %v728 = vunpack.c.h.b16 %v632
        %v729 = vunpack.c.l.b16 %v633
        %v730 = vunpack.c.l.b16 %v634
        %v731 = vunpack.c.h.b16 %v634
        %v732 = vunpack.c.l.b16 %v635
        %v733 = vpack.c.b16 %v688, %v685
        %v734 = vpack.c.b16 %v689, %v686
        %v735 = vpack.c.b16 %v690, %v687
        %v736 = vpack.c.b16 %v694, %v691
        %v737 = vpack.c.b16 %v695, %v692
        %v738 = vpack.c.b16 %v696, %v693
        %v739 = vpack.c.b16 %v700, %v697
        %v740 = vpack.c.b16 %v701, %v698
        %v741 = vpack.c.b16 %v702, %v699
        %v742 = vpack.c.b16 %v706, %v703
        %v743 = vpack.c.b16 %v707, %v704
        %v744 = vpack.c.b16 %v708, %v705
        %v745 = vpack.c.b16 %v712, %v709
        %v746 = vpack.c.b16 %v713, %v710
        %v747 = vpack.c.b16 %v714, %v711
        %v748 = vpack.c.b16 %v718, %v715
        %v749 = vpack.c.b16 %v719, %v716
        %v750 = vpack.c.b16 %v720, %v717
        %v751 = vpack.c.b16 %v724, %v721
        %v752 = vpack.c.b16 %v725, %v722
        %v753 = vpack.c.b16 %v726, %v723
        %v754 = vpack.c.b16 %v730, %v727
        %v755 = vpack.c.b16 %v731, %v728
        %v756 = vpack.c.b16 %v732, %v729
        %781 = vmatprep.subr.bf16.mxu0 %v755
        %782 = vmatpush1.bf16.msra.mxu0 %v754
        %783 = vmatprep.subr.bf16.mxu0 %v752
        %784 = vmatpush1.bf16.msra.mxu0 %v751
        %785 = vmatprep.subr.bf16.mxu0 %v749
        %786 = vmatpush1.bf16.msra.mxu0 %v748
        %787 = vmatprep.subr.bf16.mxu0 %v746
        %788 = vmatpush1.bf16.msra.mxu0 %v745
        %789 = vmatprep.subr.bf16.mxu0 %v743
        %790 = vmatpush1.bf16.msra.mxu0 %v742
        %791 = vmatprep.subr.bf16.mxu0 %v740
        %792 = vmatpush1.bf16.msra.mxu0 %v739
        %793 = vmatprep.subr.bf16.mxu0 %v737
        %794 = vmatpush1.bf16.msra.mxu0 %v736
        %795 = vmatprep.subr.bf16.mxu0 %v734
        %796 = vmatpush1.bf16.msra.mxu0 %v733
        %797 = vmatprep.subr.bf16.mxu0 0
        %798 = vmatpush2.bf16.msra.mxu0 0
        %799 = vmatprep.subr.bf16.mxu0 0
        %800 = vmatpush2.bf16.msra.mxu0 0
        %801 = vmatprep.subr.bf16.mxu0 0
        %802 = vmatpush2.bf16.msra.mxu0 0
        %803 = vmatprep.subr.bf16.mxu0 0
        %804 = vmatpush2.bf16.msra.mxu0 0
        %805 = vmatprep.subr.bf16.mxu0 0
        %806 = vmatpush2.bf16.msra.mxu0 0
        %807 = vmatprep.subr.bf16.mxu0 0
        %808 = vmatpush2.bf16.msra.mxu0 0
        %809 = vmatprep.subr.bf16.mxu0 0
        %810 = vmatpush2.bf16.msra.mxu0 0
        %811 = vmatprep.subr.bf16.mxu0 0
        %812 = vmatpush2.bf16.msra.mxu0 0
        %813 = vmatprep.mubr.bf16.mxu0 0
        %814 = vmatmul.mubr.bf16.gmra.mxu0 %v596
        %v815 = vpop.f32.mrf.mxu0
        %v816 = vadd.f32 %v641, %v815
        %v817 = vpop.f32.mrf.mxu0
        %v818 = vadd.f32 %v645, %v817
        %v819 = vpop.f32.mrf.mxu0
        %v820 = vadd.f32 %v641, %v819
        %v821 = vpop.f32.mrf.mxu0
        %v822 = vadd.f32 %v645, %v821
        %823 = vmatprep.mubr.bf16.mxu0 0
        %824 = vmatmul.mubr.bf16.gmra.mxu0 %v597
        %v825 = vpop.f32.mrf.mxu0
        %v826 = vadd.f32 %v641, %v825
        %v827 = vpop.f32.mrf.mxu0
        %v828 = vadd.f32 %v645, %v827
        %v829 = vpop.f32.mrf.mxu0
        %v830 = vadd.f32 %v641, %v829
        %v831 = vpop.f32.mrf.mxu0
        %v832 = vadd.f32 %v645, %v831
        %833 = vmatprep.mubr.bf16.mxu0 0
        %834 = vmatmul.mubr.bf16.gmra.mxu0 %v598
        %v835 = vpop.f32.mrf.mxu0
        %v836 = vadd.f32 %v641, %v835
        %v837 = vpop.f32.mrf.mxu0
        %v838 = vadd.f32 %v645, %v837
        %v839 = vpop.f32.mrf.mxu0
        %v840 = vadd.f32 %v641, %v839
        %v841 = vpop.f32.mrf.mxu0
        %v842 = vadd.f32 %v645, %v841
        %843 = vmatprep.mubr.bf16.mxu0 0
        %844 = vmatmul.mubr.bf16.gmra.mxu0 %v599
        %v845 = vpop.f32.mrf.mxu0
        %v846 = vadd.f32 %v641, %v845
        %v847 = vpop.f32.mrf.mxu0
        %v848 = vadd.f32 %v645, %v847
        %v849 = vpop.f32.mrf.mxu0
        %v850 = vadd.f32 %v641, %v849
        %v851 = vpop.f32.mrf.mxu0
        %v852 = vadd.f32 %v645, %v851
        %853 = vmatprep.mubr.bf16.mxu0 0
        %854 = vmatmul.mubr.bf16.gmra.mxu0 %v600
        %v855 = vpop.f32.mrf.mxu0
        %v856 = vadd.f32 %v641, %v855
        %v857 = vpop.f32.mrf.mxu0
        %v858 = vadd.f32 %v645, %v857
        %v859 = vpop.f32.mrf.mxu0
        %v860 = vadd.f32 %v641, %v859
        %v861 = vpop.f32.mrf.mxu0
        %v862 = vadd.f32 %v645, %v861
        %863 = vmatprep.mubr.bf16.mxu0 0
        %864 = vmatmul.mubr.bf16.gmra.mxu0 %v601
        %v865 = vpop.f32.mrf.mxu0
        %v866 = vadd.f32 %v641, %v865
        %v867 = vpop.f32.mrf.mxu0
        %v868 = vadd.f32 %v645, %v867
        %v869 = vpop.f32.mrf.mxu0
        %v870 = vadd.f32 %v641, %v869
        %v871 = vpop.f32.mrf.mxu0
        %v872 = vadd.f32 %v645, %v871
        %873 = vmatprep.mubr.bf16.mxu0 0
        %874 = vmatmul.mubr.bf16.gmra.mxu0 %v602
        %v875 = vpop.f32.mrf.mxu0
        %v876 = vadd.f32 %v641, %v875
        %v877 = vpop.f32.mrf.mxu0
        %v878 = vadd.f32 %v645, %v877
        %v879 = vpop.f32.mrf.mxu0
        %v880 = vadd.f32 %v641, %v879
        %v881 = vpop.f32.mrf.mxu0
        %v882 = vadd.f32 %v645, %v881
        %883 = vmatprep.mubr.bf16.mxu0 0
        %884 = vmatmul.mubr.bf16.gmra.mxu0 %v603
        %v885 = vpop.f32.mrf.mxu0
        %v886 = vadd.f32 %v641, %v885
        %v887 = vpop.f32.mrf.mxu0
        %v888 = vadd.f32 %v645, %v887
        %v889 = vpop.f32.mrf.mxu0
        %v890 = vadd.f32 %v641, %v889
        %v891 = vpop.f32.mrf.mxu0
        %v892 = vadd.f32 %v645, %v891
        %893 = vdwg.mxu0
        %894 = vmatprep.subr.bf16.mxu0 0
        %895 = vmatpush1.bf16.msra.mxu0 %v756
        %896 = vmatprep.subr.bf16.mxu0 0
        %897 = vmatpush1.bf16.msra.mxu0 %v753
        %898 = vmatprep.subr.bf16.mxu0 0
        %899 = vmatpush1.bf16.msra.mxu0 %v750
        %900 = vmatprep.subr.bf16.mxu0 0
        %901 = vmatpush1.bf16.msra.mxu0 %v747
        %902 = vmatprep.subr.bf16.mxu0 0
        %903 = vmatpush1.bf16.msra.mxu0 %v744
        %904 = vmatprep.subr.bf16.mxu0 0
        %905 = vmatpush1.bf16.msra.mxu0 %v741
        %906 = vmatprep.subr.bf16.mxu0 0
        %907 = vmatpush1.bf16.msra.mxu0 %v738
        %908 = vmatprep.subr.bf16.mxu0 0
        %909 = vmatpush1.bf16.msra.mxu0 %v735
        %910 = vmatprep.subr.bf16.mxu0 0
        %911 = vmatpush2.bf16.msra.mxu0 0
        %912 = vmatprep.subr.bf16.mxu0 0
        %913 = vmatpush2.bf16.msra.mxu0 0
        %914 = vmatprep.subr.bf16.mxu0 0
        %915 = vmatpush2.bf16.msra.mxu0 0
        %916 = vmatprep.subr.bf16.mxu0 0
        %917 = vmatpush2.bf16.msra.mxu0 0
        %918 = vmatprep.subr.bf16.mxu0 0
        %919 = vmatpush2.bf16.msra.mxu0 0
        %920 = vmatprep.subr.bf16.mxu0 0
        %921 = vmatpush2.bf16.msra.mxu0 0
        %922 = vmatprep.subr.bf16.mxu0 0
        %923 = vmatpush2.bf16.msra.mxu0 0
        %924 = vmatprep.subr.bf16.mxu0 0
        %925 = vmatpush2.bf16.msra.mxu0 0
        %926 = vmatprep.mubr.bf16.mxu0 0
        %927 = vmatmul.mubr.bf16.gmra.mxu0 %v596
        %v928 = vpop.f32.mrf.mxu0
        %v929 = vadd.f32 %v649, %v928
        %v930 = vpop.f32.mrf.mxu0
        %v931 = vpop.f32.mrf.mxu0
        %v932 = vadd.f32 %v649, %v931
        %v933 = vpop.f32.mrf.mxu0
        %934 = vmatprep.mubr.bf16.mxu0 0
        %935 = vmatmul.mubr.bf16.gmra.mxu0 %v597
        %v936 = vpop.f32.mrf.mxu0
        %v937 = vadd.f32 %v649, %v936
        %v938 = vpop.f32.mrf.mxu0
        %v939 = vpop.f32.mrf.mxu0
        %v940 = vadd.f32 %v649, %v939
        %v941 = vpop.f32.mrf.mxu0
        %942 = vmatprep.mubr.bf16.mxu0 0
        %943 = vmatmul.mubr.bf16.gmra.mxu0 %v598
        %v944 = vpop.f32.mrf.mxu0
        %v945 = vadd.f32 %v649, %v944
        %v946 = vpop.f32.mrf.mxu0
        %v947 = vpop.f32.mrf.mxu0
        %v948 = vadd.f32 %v649, %v947
        %v949 = vpop.f32.mrf.mxu0
        %950 = vmatprep.mubr.bf16.mxu0 0
        %951 = vmatmul.mubr.bf16.gmra.mxu0 %v599
        %v952 = vpop.f32.mrf.mxu0
        %v953 = vadd.f32 %v649, %v952
        %v954 = vpop.f32.mrf.mxu0
        %v955 = vpop.f32.mrf.mxu0
        %v956 = vadd.f32 %v649, %v955
        %v957 = vpop.f32.mrf.mxu0
        %958 = vmatprep.mubr.bf16.mxu0 0
        %959 = vmatmul.mubr.bf16.gmra.mxu0 %v600
        %v960 = vpop.f32.mrf.mxu0
        %v961 = vadd.f32 %v649, %v960
        %v962 = vpop.f32.mrf.mxu0
        %v963 = vpop.f32.mrf.mxu0
        %v964 = vadd.f32 %v649, %v963
        %v965 = vpop.f32.mrf.mxu0
        %966 = vmatprep.mubr.bf16.mxu0 0
        %967 = vmatmul.mubr.bf16.gmra.mxu0 %v601
        %v968 = vpop.f32.mrf.mxu0
        %v969 = vadd.f32 %v649, %v968
        %v970 = vpop.f32.mrf.mxu0
        %v971 = vpop.f32.mrf.mxu0
        %v972 = vadd.f32 %v649, %v971
        %v973 = vpop.f32.mrf.mxu0
        %974 = vmatprep.mubr.bf16.mxu0 0
        %975 = vmatmul.mubr.bf16.gmra.mxu0 %v602
        %v976 = vpop.f32.mrf.mxu0
        %v977 = vadd.f32 %v649, %v976
        %v978 = vpop.f32.mrf.mxu0
        %v979 = vpop.f32.mrf.mxu0
        %v980 = vadd.f32 %v649, %v979
        %v981 = vpop.f32.mrf.mxu0
        %982 = vmatprep.mubr.bf16.mxu0 0
        %983 = vmatmul.mubr.bf16.gmra.mxu0 %v603
        %v984 = vpop.f32.mrf.mxu0
        %v985 = vadd.f32 %v649, %v984
        %v986 = vpop.f32.mrf.mxu0
        %v987 = vpop.f32.mrf.mxu0
        %v988 = vadd.f32 %v649, %v987
        %v989 = vpop.f32.mrf.mxu0
        %990 = vdwg.mxu0
        %v991 = vmul.f32 %v816, 0.17677669
        %v992 = vmul.f32 %v820, 0.17677669
        %v993 = vmul.f32 %v826, 0.17677669
        %v994 = vmul.f32 %v830, 0.17677669
        %v995 = vmul.f32 %v836, 0.17677669
        %v996 = vmul.f32 %v840, 0.17677669
        %v997 = vmul.f32 %v846, 0.17677669
        %v998 = vmul.f32 %v850, 0.17677669
        %v999 = vmul.f32 %v856, 0.17677669
        %v1000 = vmul.f32 %v860, 0.17677669
        %v1001 = vmul.f32 %v866, 0.17677669
        %v1002 = vmul.f32 %v870, 0.17677669
        %v1003 = vmul.f32 %v876, 0.17677669
        %v1004 = vmul.f32 %v880, 0.17677669
        %v1005 = vmul.f32 %v886, 0.17677669
        %v1006 = vmul.f32 %v890, 0.17677669
        %v1007 = vpack.c.bf16 %v992, %v991
        %v1008 = vpack.c.bf16 %v994, %v993
        %v1009 = vpack.c.bf16 %v996, %v995
        %v1010 = vpack.c.bf16 %v998, %v997
        %v1011 = vpack.c.bf16 %v1000, %v999
        %v1012 = vpack.c.bf16 %v1002, %v1001
        %v1013 = vpack.c.bf16 %v1004, %v1003
        %v1014 = vpack.c.bf16 %v1006, %v1005
        %v1023 = vunpack.c.l.b16 %v1007
        %v1024 = vunpack.c.h.b16 %v1007
        %v1025 = vunpack.c.l.b16 %v1008
        %v1026 = vunpack.c.h.b16 %v1008
        %v1027 = vunpack.c.l.b16 %v1009
        %v1028 = vunpack.c.h.b16 %v1009
        %v1029 = vunpack.c.l.b16 %v1010
        %v1030 = vunpack.c.h.b16 %v1010
        %v1031 = vunpack.c.l.b16 %v1011
        %v1032 = vunpack.c.h.b16 %v1011
        %v1033 = vunpack.c.l.b16 %v1012
        %v1034 = vunpack.c.h.b16 %v1012
        %v1035 = vunpack.c.l.b16 %v1013
        %v1036 = vunpack.c.h.b16 %v1013
        %v1037 = vunpack.c.l.b16 %v1014
        %v1038 = vunpack.c.h.b16 %v1014
        %v1039 = vpack.c.b16 %v1023, %v1023
        %v1040 = vpack.c.b16 %v1024, %v1024
        %v1041 = vpack.c.b16 %v1025, %v1025
        %v1042 = vpack.c.b16 %v1026, %v1026
        %v1043 = vpack.c.b16 %v1027, %v1027
        %v1044 = vpack.c.b16 %v1028, %v1028
        %v1045 = vpack.c.b16 %v1029, %v1029
        %v1046 = vpack.c.b16 %v1030, %v1030
        %v1047 = vpack.c.b16 %v1031, %v1031
        %v1048 = vpack.c.b16 %v1032, %v1032
        %v1049 = vpack.c.b16 %v1033, %v1033
        %v1050 = vpack.c.b16 %v1034, %v1034
        %v1051 = vpack.c.b16 %v1035, %v1035
        %v1052 = vpack.c.b16 %v1036, %v1036
        %v1053 = vpack.c.b16 %v1037, %v1037
        %v1054 = vpack.c.b16 %v1038, %v1038
        %1071 = vst [vmem:[%s337] sm:$0xf] %v1039
        %1072 = vst [vmem:[%s337 + $0x4] sm:$0xf] %v1040
        %1073 = vst [vmem:[%s337 + $0x8] sm:$0xf] %v1041
        %1074 = vst [vmem:[%s337 + $0xc] sm:$0xf] %v1042
        %1075 = vst [vmem:[%s337 + $0x10] sm:$0xf] %v1043
        %1076 = vst [vmem:[%s337 + $0x14] sm:$0xf] %v1044
        %1077 = vst [vmem:[%s337 + $0x18] sm:$0xf] %v1045
        %1078 = vst [vmem:[%s337 + $0x1c] sm:$0xf] %v1046
        %1079 = vst [vmem:[%s337 + $0x20] sm:$0xf] %v1047
        %1080 = vst [vmem:[%s337 + $0x24] sm:$0xf] %v1048
        %1081 = vst [vmem:[%s337 + $0x28] sm:$0xf] %v1049
        %1082 = vst [vmem:[%s337 + $0x2c] sm:$0xf] %v1050
        %1083 = vst [vmem:[%s337 + $0x30] sm:$0xf] %v1051
        %1084 = vst [vmem:[%s337 + $0x34] sm:$0xf] %v1052
        %1085 = vst [vmem:[%s337 + $0x38] sm:$0xf] %v1053
        %1086 = vst [vmem:[%s337 + $0x3c] sm:$0xf] %v1054
        %v1087 = vpack.c.bf16 %v822, %v818
        %v1088 = vpack.c.bf16 %v832, %v828
        %v1089 = vpack.c.bf16 %v842, %v838
        %v1090 = vpack.c.bf16 %v852, %v848
        %v1091 = vpack.c.bf16 %v862, %v858
        %v1092 = vpack.c.bf16 %v872, %v868
        %v1093 = vpack.c.bf16 %v882, %v878
        %v1094 = vpack.c.bf16 %v892, %v888
        %v1103 = vunpack.c.l.b16 %v1087
        %v1104 = vunpack.c.h.b16 %v1087
        %v1105 = vunpack.c.l.b16 %v1088
        %v1106 = vunpack.c.h.b16 %v1088
        %v1107 = vunpack.c.l.b16 %v1089
        %v1108 = vunpack.c.h.b16 %v1089
        %v1109 = vunpack.c.l.b16 %v1090
        %v1110 = vunpack.c.h.b16 %v1090
        %v1111 = vunpack.c.l.b16 %v1091
        %v1112 = vunpack.c.h.b16 %v1091
        %v1113 = vunpack.c.l.b16 %v1092
        %v1114 = vunpack.c.h.b16 %v1092
        %v1115 = vunpack.c.l.b16 %v1093
        %v1116 = vunpack.c.h.b16 %v1093
        %v1117 = vunpack.c.l.b16 %v1094
        %v1118 = vunpack.c.h.b16 %v1094
        %v1119 = vpack.c.b16 %v1103, %v1103
        %v1120 = vpack.c.b16 %v1104, %v1104
        %v1121 = vpack.c.b16 %v1105, %v1105
        %v1122 = vpack.c.b16 %v1106, %v1106
        %v1123 = vpack.c.b16 %v1107, %v1107
        %v1124 = vpack.c.b16 %v1108, %v1108
        %v1125 = vpack.c.b16 %v1109, %v1109
        %v1126 = vpack.c.b16 %v1110, %v1110
        %v1127 = vpack.c.b16 %v1111, %v1111
        %v1128 = vpack.c.b16 %v1112, %v1112
        %v1129 = vpack.c.b16 %v1113, %v1113
        %v1130 = vpack.c.b16 %v1114, %v1114
        %v1131 = vpack.c.b16 %v1115, %v1115
        %v1132 = vpack.c.b16 %v1116, %v1116
        %v1133 = vpack.c.b16 %v1117, %v1117
        %v1134 = vpack.c.b16 %v1118, %v1118
        %1151 = vst [vmem:[%s344] sm:$0xf] %v1119
        %1152 = vst [vmem:[%s344 + $0x4] sm:$0xf] %v1120
        %1153 = vst [vmem:[%s344 + $0x8] sm:$0xf] %v1121
        %1154 = vst [vmem:[%s344 + $0xc] sm:$0xf] %v1122
        %1155 = vst [vmem:[%s344 + $0x10] sm:$0xf] %v1123
        %1156 = vst [vmem:[%s344 + $0x14] sm:$0xf] %v1124
        %1157 = vst [vmem:[%s344 + $0x18] sm:$0xf] %v1125
        %1158 = vst [vmem:[%s344 + $0x1c] sm:$0xf] %v1126
        %1159 = vst [vmem:[%s344 + $0x20] sm:$0xf] %v1127
        %1160 = vst [vmem:[%s344 + $0x24] sm:$0xf] %v1128
        %1161 = vst [vmem:[%s344 + $0x28] sm:$0xf] %v1129
        %1162 = vst [vmem:[%s344 + $0x2c] sm:$0xf] %v1130
        %1163 = vst [vmem:[%s344 + $0x30] sm:$0xf] %v1131
        %1164 = vst [vmem:[%s344 + $0x34] sm:$0xf] %v1132
        %1165 = vst [vmem:[%s344 + $0x38] sm:$0xf] %v1133
        %1166 = vst [vmem:[%s344 + $0x3c] sm:$0xf] %v1134
        %v1167 = vpack.c.bf16 %v932, %v929
        %v1168 = vpack.c.bf16 %v940, %v937
        %v1169 = vpack.c.bf16 %v948, %v945
        %v1170 = vpack.c.bf16 %v956, %v953
        %v1171 = vpack.c.bf16 %v964, %v961
        %v1172 = vpack.c.bf16 %v972, %v969
        %v1173 = vpack.c.bf16 %v980, %v977
        %v1174 = vpack.c.bf16 %v988, %v985
        %v1183 = vunpack.c.l.b16 %v1167
        %v1184 = vunpack.c.h.b16 %v1167
        %v1185 = vunpack.c.l.b16 %v1168
        %v1186 = vunpack.c.h.b16 %v1168
        %v1187 = vunpack.c.l.b16 %v1169
        %v1188 = vunpack.c.h.b16 %v1169
        %v1189 = vunpack.c.l.b16 %v1170
        %v1190 = vunpack.c.h.b16 %v1170
        %v1191 = vunpack.c.l.b16 %v1171
        %v1192 = vunpack.c.h.b16 %v1171
        %v1193 = vunpack.c.l.b16 %v1172
        %v1194 = vunpack.c.h.b16 %v1172
        %v1195 = vunpack.c.l.b16 %v1173
        %v1196 = vunpack.c.h.b16 %v1173
        %v1197 = vunpack.c.l.b16 %v1174
        %v1198 = vunpack.c.h.b16 %v1174
        %v1199 = vpack.c.b16 %v1183, %v1183
        %v1200 = vpack.c.b16 %v1184, %v1184
        %v1201 = vpack.c.b16 %v1185, %v1185
        %v1202 = vpack.c.b16 %v1186, %v1186
        %v1203 = vpack.c.b16 %v1187, %v1187
        %v1204 = vpack.c.b16 %v1188, %v1188
        %v1205 = vpack.c.b16 %v1189, %v1189
        %v1206 = vpack.c.b16 %v1190, %v1190
        %v1207 = vpack.c.b16 %v1191, %v1191
        %v1208 = vpack.c.b16 %v1192, %v1192
        %v1209 = vpack.c.b16 %v1193, %v1193
        %v1210 = vpack.c.b16 %v1194, %v1194
        %v1211 = vpack.c.b16 %v1195, %v1195
        %v1212 = vpack.c.b16 %v1196, %v1196
        %v1213 = vpack.c.b16 %v1197, %v1197
        %v1214 = vpack.c.b16 %v1198, %v1198
        %1231 = vst [vmem:[%s351] sm:$0xf] %v1199
        %1232 = vst [vmem:[%s351 + $0x4] sm:$0xf] %v1200
        %1233 = vst [vmem:[%s351 + $0x8] sm:$0xf] %v1201
        %1234 = vst [vmem:[%s351 + $0xc] sm:$0xf] %v1202
        %1235 = vst [vmem:[%s351 + $0x10] sm:$0xf] %v1203
        %1236 = vst [vmem:[%s351 + $0x14] sm:$0xf] %v1204
        %1237 = vst [vmem:[%s351 + $0x18] sm:$0xf] %v1205
        %1238 = vst [vmem:[%s351 + $0x1c] sm:$0xf] %v1206
        %1239 = vst [vmem:[%s351 + $0x20] sm:$0xf] %v1207
        %1240 = vst [vmem:[%s351 + $0x24] sm:$0xf] %v1208
        %1241 = vst [vmem:[%s351 + $0x28] sm:$0xf] %v1209
        %1242 = vst [vmem:[%s351 + $0x2c] sm:$0xf] %v1210
        %1243 = vst [vmem:[%s351 + $0x30] sm:$0xf] %v1211
        %1244 = vst [vmem:[%s351 + $0x34] sm:$0xf] %v1212
        %1245 = vst [vmem:[%s351 + $0x38] sm:$0xf] %v1213
        %1246 = vst [vmem:[%s351 + $0x3c] sm:$0xf] %v1214
        %s1247 = sand.u32 %s163, 1
        %s1248 = scalar_lea.sflag [#allocation4], %s1247
        %s1249 = sand.u32 %s163, 1
        %s1250 = smul.addr %s1249, 64
        %s1251 = scalar_lea.vmem [#allocation7], %s1250
        %s1252 = sand.u32 %s29, 1
        %s1253 = scalar_lea.sflag [#allocation9], %s1252
        %s1254 = sand.u32 %s191, 1
        %s1255 = smul.addr %s1254, 64
        %s1256 = scalar_lea.vmem [#allocation8], %s1255
        %s1257 = sand.u32 %s29, 1
        %s1258 = scalar_lea.sflag [#allocation9], %s1257
        %s1259 = sand.u32 %s219, 1
        %s1260 = smul.addr %s1259, 64
        %s1261 = scalar_lea.vmem [#allocation10], %s1260
        // Predicated region
        $region49: #{tpu_custom_call.1} parent=39 // pred_check
          %p1262 = pneg %p173
        $region50: #{tpu_custom_call.1} parent=39 // pred_check_branch
          %1264 = sbr.rel (%p1262) target = $region52
        $region51: #{tpu_custom_call.1} parent=39 // pred_region
          %s1265 = smul.u32 16, %s34
          %s1267 = ssub.s32 1024, 1024
          %1268 = vsyncadd %s1248, %s1267
          %s1269 = smul.addr %s33, 32
          %s1270 = sadd.s32 %s1265, %s1269
          %s1271 = smul.addr %s1270, 64
          %s1272 = scalar_lea.hbm %s5, %s1271
          %s1273 = sshll.u32 %s1251, 4
          %s1274 = int_to_ptr.vmem [resolvable:$true] %s1273
          %1279 = dma.vmem_to_hbm [thread:$0]  %s1274, 1024, %s1272, %s1248, 64, 64, 4
        $region52: #{tpu_custom_call.1} parent=39 // pred_fallthru
          _
        // Predicated region
        $region53: #{tpu_custom_call.1} parent=39 // pred_check
          %p1280 = pneg %p201
        $region54: #{tpu_custom_call.1} parent=39 // pred_check_branch
          %1282 = sbr.rel (%p1280) target = $region56
        $region55: #{tpu_custom_call.1} parent=39 // pred_region
          %s1283 = smul.u32 16, %s34
          %s1285 = ssub.s32 1024, 1024
          %1286 = vsyncadd %s1253, %s1285
          %s1287 = smul.addr %s33, 32
          %s1288 = sadd.s32 %s1283, %s1287
          %s1289 = smul.addr %s1288, 64
          %s1290 = scalar_lea.hbm %s6, %s1289
          %s1291 = sshll.u32 %s1256, 4
          %s1292 = int_to_ptr.vmem [resolvable:$true] %s1291
          %1297 = dma.vmem_to_hbm [thread:$0]  %s1292, 1024, %s1290, %s1253, 64, 64, 4
        $region56: #{tpu_custom_call.1} parent=39 // pred_fallthru
          _
        // Predicated region
        $region57: #{tpu_custom_call.1} parent=39 // pred_check
          %p1298 = pneg %p229
        $region58: #{tpu_custom_call.1} parent=39 // pred_check_branch
          %1300 = sbr.rel (%p1298) target = $region60
        $region59: #{tpu_custom_call.1} parent=39 // pred_region
          %s1301 = smul.u32 16, %s34
          %s1303 = ssub.s32 1024, 1024
          %1304 = vsyncadd %s1258, %s1303
          %s1305 = smul.addr %s33, 32
          %s1306 = sadd.s32 %s1301, %s1305
          %s1307 = smul.addr %s1306, 64
          %s1308 = scalar_lea.hbm %s7, %s1307
          %s1309 = sshll.u32 %s1261, 4
          %s1310 = int_to_ptr.vmem [resolvable:$true] %s1309
          %1315 = dma.vmem_to_hbm [thread:$0]  %s1310, 1024, %s1308, %s1258, 64, 64, 4
        $region60: #{tpu_custom_call.1} parent=39 // pred_fallthru
          _
      $region40: #{tpu_custom_call.1} parent=5 // pred_fallthru
        _
      %p1316 = scmp.le.s32.totalorder 2, %s24
      // Predicated region
      $region61: #{tpu_custom_call.1} parent=5 // pred_check
        %p1317 = pneg %p1316
      $region62: #{tpu_custom_call.1} parent=5 // pred_check_branch
        %1319 = sbr.rel (%p1317) target = $region64
      $region63: #{tpu_custom_call.1} parent=5 // pred_region
        %s1320 = ssub.s32 %s24, 2
        // Predicated region
        $region65: #{tpu_custom_call.1} parent=63 // pred_check
          %p1321 = pneg %p179
        $region66: #{tpu_custom_call.1} parent=63 // pred_check_branch
          %1323 = sbr.rel (%p1321) target = $region68
        $region67: #{tpu_custom_call.1} parent=63 // pred_region
          %s1324 = sand.u32 %s164, 1
          %s1325 = scalar_lea.sflag [#allocation4], %s1324
          %s1326 = sand.u32 %s164, 1
          %s1327 = smul.addr %s1326, 64
          %s1328 = scalar_lea.vmem [#allocation7], %s1327
          %1329 = dma.done %s1325, 1024
        $region68: #{tpu_custom_call.1} parent=63 // pred_fallthru
          _
        // Predicated region
        $region69: #{tpu_custom_call.1} parent=63 // pred_check
          %p1330 = pneg %p207
        $region70: #{tpu_custom_call.1} parent=63 // pred_check_branch
          %1332 = sbr.rel (%p1330) target = $region72
        $region71: #{tpu_custom_call.1} parent=63 // pred_region
          %s1333 = sand.u32 %s30, 1
          %s1334 = scalar_lea.sflag [#allocation9], %s1333
          %s1335 = sand.u32 %s192, 1
          %s1336 = smul.addr %s1335, 64
          %s1337 = scalar_lea.vmem [#allocation8], %s1336
          %1338 = dma.done %s1334, 1024
        $region72: #{tpu_custom_call.1} parent=63 // pred_fallthru
          _
        // Predicated region
        $region73: #{tpu_custom_call.1} parent=63 // pred_check
          %p1339 = pneg %p235
        $region74: #{tpu_custom_call.1} parent=63 // pred_check_branch
          %1341 = sbr.rel (%p1339) target = $region76
        $region75: #{tpu_custom_call.1} parent=63 // pred_region
          %s1342 = sand.u32 %s30, 1
          %s1343 = scalar_lea.sflag [#allocation9], %s1342
          %s1344 = sand.u32 %s220, 1
          %s1345 = smul.addr %s1344, 64
          %s1346 = scalar_lea.vmem [#allocation10], %s1345
          %1347 = dma.done %s1343, 1024
        $region76: #{tpu_custom_call.1} parent=63 // pred_fallthru
          _
      $region64: #{tpu_custom_call.1} parent=5 // pred_fallthru
        _
    $region6: #{tpu_custom_call.1} parent=1 // loop_footer
      %s28 = sadd.s32 1, %s24
    $region7: #{tpu_custom_call.1} parent=1 // loop_footer_branch
      %23 = sbr.rel target = $region3
    $region8: #{tpu_custom_call.1} parent=1 // loop_exit
      _
    %1348 = vsyncpa [#allocation3], 1
    %s1349 = scalar_lea.sflag [#allocation3], 1
    %1350 = vsyncpa %s1349, 1
    %1351 = vsyncpa [#allocation6], 1
    %1352 = vsyncpa [#allocation4], 1
    %s1353 = scalar_lea.sflag [#allocation4], 1
    %1354 = vsyncpa %s1353, 1
    %1355 = vsyncpa [#allocation9], 1
    %s1356 = scalar_lea.sflag [#allocation9], 1
    %1357 = vsyncpa %s1356, 1

</llo_original>
